<compile_context>
chip_gen: v7x
topology: tpu7x:2x2x1
jax: 0.10.0
libtpu: 0.0.40
codegen_flags: <defaults>
</compile_context>

<pallas_src>
import math

import jax
import jax.numpy as jnp
from jax.experimental import pallas as pl
from jax.experimental.pallas import tpu as pltpu

_LANE = 128
_SUBLANE = 8
# ~6 MiB per block -> 2 (in) + 2 (out) double buffers = ~24 MiB total.
_BLOCK_BYTES = 6 * 1024 * 1024
_VMEM_LIMIT = 32 * 1024 * 1024


def _copy_kernel(x_ref, o_ref):
    # Full-tile, lane-dense copy: DMA in / vld / vst / DMA out, no masked
    # stores, no cross-lane work.
    o_ref[...] = x_ref[...]


def _round_down(v, m):
    return (v // m) * m


def flatten(x):
    """Pallas equivalent of Flatten.forward: (B, ...) -> (B, prod(rest))."""
    B = x.shape[0]
    N = math.prod(x.shape[1:])
    total = B * N
    itemsize = jnp.dtype(x.dtype).itemsize

    cost = pl.CostEstimate(flops=0, transcendentals=0,
                           bytes_accessed=2 * total * itemsize)
    cparams = pltpu.CompilerParams(
        dimension_semantics=("parallel",),
        vmem_limit_bytes=_VMEM_LIMIT)

    if total % _LANE == 0:
        # Layout-friendly slab: lane dim fully dense, sublanes fully packed.
        R = total // _LANE
        x_slab = jnp.reshape(x, (R, _LANE))     # metadata-only

        # Byte-budgeted row block, rounded to a multiple of 32 sublanes
        # (covers f32 / bf16 / int8 sublane packing), clamped to the slab.
        tr = _BLOCK_BYTES // (_LANE * itemsize)
        tr = max(_round_down(tr, 32), _SUBLANE)
        if tr >= R:
            tr = R                               # tiny input: one full block
        grid = (pl.cdiv(R, tr),)

        out = pl.pallas_call(
            _copy_kernel,
            out_shape=jax.ShapeDtypeStruct((R, _LANE), x.dtype),
            grid_spec=pltpu.PrefetchScalarGridSpec(
                num_scalar_prefetch=0,
                grid=grid,
                in_specs=[pl.BlockSpec((tr, _LANE), lambda i: (i, 0))],
                out_specs=pl.BlockSpec((tr, _LANE), lambda i: (i, 0)),
            ),
            compiler_params=cparams,
            cost_estimate=cost,
        )(x_slab)
        return jnp.reshape(out, (B, N))          # metadata-only

    # Fallback: total elements not a multiple of 128.  Tile over the batch
    # dim with a byte-budgeted block; the last dim equals the full array dim
    # so the (8, 128) rule is satisfied.  Lane-partial stores are unavoidable
    # here without a padding copy (which would cost an extra HBM pass).
    x_flat = jnp.reshape(x, (B, N))
    tb = _BLOCK_BYTES // max(N * itemsize, 1)
    if B <= _SUBLANE or tb < _SUBLANE:
        tb = B                                   # one block over the batch
    else:
        tb = max(min(_round_down(tb, _SUBLANE), _round_down(B, _SUBLANE)),
                 _SUBLANE)
    grid = (pl.cdiv(B, tb),)

    return pl.pallas_call(
        _copy_kernel,
        out_shape=jax.ShapeDtypeStruct((B, N), x.dtype),
        grid_spec=pltpu.PrefetchScalarGridSpec(
            num_scalar_prefetch=0,
            grid=grid,
            in_specs=[pl.BlockSpec((tb, N), lambda i: (i, 0))],
            out_specs=pl.BlockSpec((tb, N), lambda i: (i, 0)),
        ),
        compiler_params=cparams,
        cost_estimate=cost,
    )(x_flat)


if __name__ == "__main__":
    key = jax.random.PRNGKey(0)

    # Main path: total elements (2*4*16*16 = 2048) is a multiple of 128.
    B, C, H, W = 2, 4, 16, 16
    x = jax.random.normal(key, (B, C, H, W), dtype=jnp.float32)
    y = jax.block_until_ready(flatten(x))
    ref = jnp.reshape(x, (B, -1))
    assert y.shape == (B, C * H * W), y.shape
    assert y.dtype == x.dtype, y.dtype
    assert bool(jnp.array_equal(y, ref)), "mismatch vs reference flatten"

    # Fallback path: total elements (2*3*5*7 = 210) not a multiple of 128.
    x2 = jax.random.normal(jax.random.PRNGKey(0), (2, 3, 5, 7),
                           dtype=jnp.float32)
    y2 = jax.block_until_ready(flatten(x2))
    ref2 = jnp.reshape(x2, (2, -1))
    assert y2.shape == (2, 3 * 5 * 7), y2.shape
    assert bool(jnp.array_equal(y2, ref2)), "mismatch vs reference (fallback)"

    print("KERNEL_OK")
</pallas_src>

<mosaic_0001>
module attributes {stable_mosaic.version = 11 : i64} {
  func.func @_copy_kernel(%arg0: i32, %arg1: memref<16x128xf32, #tpu.memory_space<vmem>>, %arg2: memref<16x128xf32, #tpu.memory_space<vmem>>) attributes {dimension_semantics = [#tpu.dimension_semantics<parallel>], iteration_bounds = array<i64: 1>, scalar_prefetch = 0 : i64, scratch_operands = 0 : i64, tpu.core_type = #tpu.core_type<tc>, window_params = [{transform_indices = @transform_0, window_bounds = array<i64: 16, 128>}, {transform_indices = @transform_1, window_bounds = array<i64: 16, 128>}]} {
    %c0 = arith.constant 0 : index
    %c0_0 = arith.constant 0 : index
    %0 = vector.load %arg1[%c0, %c0_0] : memref<16x128xf32, #tpu.memory_space<vmem>>, vector<16x128xf32>
    %c0_1 = arith.constant 0 : index
    %c0_2 = arith.constant 0 : index
    %1 = vector.load %arg2[%c0_1, %c0_2] : memref<16x128xf32, #tpu.memory_space<vmem>>, vector<16x128xf32>
    tpu.vector_store %arg2[%c0_1, %c0_2], %0 {strides = array<i32>} : memref<16x128xf32, #tpu.memory_space<vmem>>, vector<16x128xf32>,
    return
  }
  func.func @transform_0(%arg0: i32) -> (i32, i32) {
    %c0_i32 = arith.constant 0 : i32
    %c0_i32_0 = arith.constant 0 : i32
    return %arg0, %c0_i32 : i32, i32
  }
  func.func @transform_1(%arg0: i32) -> (i32, i32) {
    %c0_i32 = arith.constant 0 : i32
    %c0_i32_0 = arith.constant 0 : i32
    return %arg0, %c0_i32 : i32, i32
  }
}

</mosaic_0001>

<llo_original>
// kernel: tpu_custom_call.1
$region0: #{tpu_custom_call.1}
  #allocation0 [shape = 'u32[]', space=smem, size = 0x4, offset = 0x4, fixed_abs, tag = 'smem constant byte address 0x4 - core index']
  #allocation1 [shape = 'u32[144,128]{1,0:T(1,128)}', space=vmem, size = 0x12000, scoped, tag = 'internal scratch']
  %s0 = inlined_call_operand.hbm [shape: f32[16,128], index: 0, kind: input, shape index: {}]
  %s1 = inlined_call_operand.hbm [shape: f32[16,128], index: 1, kind: output, shape index: {}]
  %s2 = sld [smem:[#allocation0]]
  $region18: #{tpu_custom_call.1} parent=0
    _
  %s4 = ssub.s32 1, %s2
  %s5 = scalar_select 0, %s4, %s2
  $region1: #{tpu_custom_call.1} parent=0
    #allocation2 [shape = 'u8[8192]{0}', space=vmem, size = 0x2000, scoped, tag = 'input window, operand 0, single buffered']
    #allocation3 [shape = 's32[1]{0}', space=sflag, size = 0x4, scoped, tag = 'scoped memory for tpu_custom_call.1']
    #allocation4 [shape = 's32[1]{0}', space=sflag, size = 0x4, scoped, tag = 'scoped memory for tpu_custom_call.1']
    #allocation5 [shape = 'u8[8192]{0}', space=vmem, size = 0x2000, scoped, tag = 'output window, operand 0, single buffered']
    %6 = vsyncpa [#allocation3], 0
    %7 = vsyncpa [#allocation4], 0
    // Predicated region
    $region2: #{tpu_custom_call.1} parent=1 // pred_check
      _
    $region3: #{tpu_custom_call.1} parent=1 // pred_check_branch
      %9 = sbr.rel (0) target = $region5
    $region4: #{tpu_custom_call.1} parent=1 // pred_region
      %s11 = ssub.s32 256, 256
      %12 = vsyncadd [#allocation3], %s11
      %s13 = sshll.u32 [#allocation2], 4
      %s14 = int_to_ptr.vmem [resolvable:$true] %s13
      %19 = dma.hbm_to_vmem [thread:$0]  %s0, 256, %s14, [#allocation3], 128, 128, 8
    $region5: #{tpu_custom_call.1} parent=1 // pred_fallthru
      _
    // Predicated region
    $region6: #{tpu_custom_call.1} parent=1 // pred_check
      _
    $region7: #{tpu_custom_call.1} parent=1 // pred_check_branch
      %21 = sbr.rel (0) target = $region9
    $region8: #{tpu_custom_call.1} parent=1 // pred_region
      %22 = dma.done [#allocation3], 256
    $region9: #{tpu_custom_call.1} parent=1 // pred_fallthru
      _
    %v23 = vld [vmem:[#allocation2] sm:$0xff]
    %v24 = vld [vmem:[#allocation2 + $0x8] sm:$0xff]
    %25 = vst [vmem:[#allocation5] sm:$0xff] %v23
    %26 = vst [vmem:[#allocation5 + $0x8] sm:$0xff] %v24
    // Predicated region
    $region10: #{tpu_custom_call.1} parent=1 // pred_check
      _
    $region11: #{tpu_custom_call.1} parent=1 // pred_check_branch
      %28 = sbr.rel (0) target = $region13
    $region12: #{tpu_custom_call.1} parent=1 // pred_region
      %s30 = ssub.s32 256, 256
      %31 = vsyncadd [#allocation4], %s30
      %s32 = sshll.u32 [#allocation5], 4
      %s33 = int_to_ptr.vmem [resolvable:$true] %s32
      %38 = dma.vmem_to_hbm [thread:$0]  %s33, 256, %s1, [#allocation4], 128, 128, 8
    $region13: #{tpu_custom_call.1} parent=1 // pred_fallthru
      _
    // Predicated region
    $region14: #{tpu_custom_call.1} parent=1 // pred_check
      _
    $region15: #{tpu_custom_call.1} parent=1 // pred_check_branch
      %40 = sbr.rel (0) target = $region17
    $region16: #{tpu_custom_call.1} parent=1 // pred_region
      %41 = dma.done [#allocation4], 256
    $region17: #{tpu_custom_call.1} parent=1 // pred_fallthru
      _
    %42 = vsyncpa [#allocation3], 1
    %43 = vsyncpa [#allocation4], 1

</llo_original>
